<compile_context>
chip_gen: v7x
topology: tpu7x:2x2x1
jax: 0.10.0
libtpu: 0.0.40
codegen_flags: <defaults>
</compile_context>

<pallas_src>
import functools

import jax
import jax.numpy as jnp
from jax.experimental import pallas as pl
from jax.experimental.pallas import tpu as pltpu

LOG_STD_MIN = -20.0
LOG_STD_MAX = 2.0

_LOG_2PI = 1.8378770664093453   # log(2*pi)
_LOG_2 = 0.6931471805599453     # log(2)


def _round_up(x, m):
    return (x + m - 1) // m * m


def _actor_kernel(
    obs_ref, w1_ref, b1_ref, w2_ref, b2_ref, wh_ref, bh_ref, eps_ref,
    out_ref,
    *, act_dim, log_std_min, log_std_max,
):
    x = obs_ref[...]

    # --- MLP trunk: Linear -> ReLU -> Linear -> ReLU (output_activation == activation) ---
    h = jnp.dot(x, w1_ref[...], preferred_element_type=jnp.float32) + b1_ref[...]
    h = jnp.maximum(h, 0.0)
    h = jnp.dot(h, w2_ref[...], preferred_element_type=jnp.float32) + b2_ref[...]
    h = jnp.maximum(h, 0.0)

    # --- fused heads: one matmul producing [mu | log_std] ---
    head = jnp.dot(h, wh_ref[...], preferred_element_type=jnp.float32) + bh_ref[...]
    mu = head[:, :act_dim]
    log_std = jnp.clip(head[:, act_dim:], log_std_min, log_std_max)
    std = jnp.exp(log_std)

    # --- rsample: a = mu + std * eps  (eps ~ N(0,1) passed in) ---
    eps = eps_ref[...]
    a = mu + std * eps

    # --- Normal(mu, std).log_prob(a): since (a - mu)/std == eps, use eps directly ---
    logp_el = -0.5 * eps * eps - log_std - jnp.float32(0.5 * _LOG_2PI)

    # --- tanh-squash correction: 2*(log(2) - a - softplus(-2a)) ---
    corr = 2.0 * (jnp.float32(_LOG_2) - a - jax.nn.softplus(-2.0 * a))

    # Sum over the action axis (obs is 2-D here, matching sum_axis == 1).
    logp = jnp.sum(logp_el - corr, axis=-1, keepdims=True)

    # --- pack outputs into one lane-dense slab: [tanh(a) | tanh(mu) | logp | zero-pad] ---
    tile_b = out_ref.shape[0]
    pad_w = out_ref.shape[1] - (2 * act_dim + 1)
    out_ref[:, 0:act_dim] = jnp.tanh(a)
    out_ref[:, act_dim:2 * act_dim] = jnp.tanh(mu)
    out_ref[:, 2 * act_dim:2 * act_dim + 1] = logp
    if pad_w > 0:
        out_ref[:, 2 * act_dim + 1:] = jnp.zeros((tile_b, pad_w), jnp.float32)


def squashed_gaussian_actor(obs, params, eps, *, tile_b=None):
    """SquashedGaussianMLPActor forward pass as a single batch-tiled Pallas kernel.

    Returns (pi_action, clipped_mu, logp_pi) matching the PyTorch module.
    """
    B, obs_dim = obs.shape
    h1 = params["b1"].shape[-1]
    h2 = params["b2"].shape[-1]
    act_dim = params["b_mu"].shape[-1]

    # Fuse the two head projections into one matmul.
    w_head = jnp.concatenate([params["w_mu"], params["w_ls"]], axis=1)   # (h2, 2*act_dim)
    b_head = jnp.concatenate([params["b_mu"], params["b_ls"]], axis=1)   # (1, 2*act_dim)

    # Batch tile: multiple of 8 sublanes, up to 256 rows (amortizes per-step
    # overhead and feeds the MXU M dimension) while staying tiny in VMEM.
    if tile_b is None:
        tile_b = min(256, _round_up(B, 8))
    tile_b = max(8, _round_up(tile_b, 8))
    padded_b = _round_up(B, tile_b)

    out_w = _round_up(2 * act_dim + 1, 128)   # lane-dense packed output width

    if padded_b != B:
        pad = padded_b - B
        obs_p = jnp.pad(obs, ((0, pad), (0, 0)))
        eps_p = jnp.pad(eps, ((0, pad), (0, 0)))
    else:
        obs_p, eps_p = obs, eps

    kernel = functools.partial(
        _actor_kernel, act_dim=act_dim,
        log_std_min=LOG_STD_MIN, log_std_max=LOG_STD_MAX,
    )

    grid = (padded_b // tile_b,)

    out = pl.pallas_call(
        kernel,
        out_shape=jax.ShapeDtypeStruct((padded_b, out_w), jnp.float32),
        grid_spec=pltpu.PrefetchScalarGridSpec(
            num_scalar_prefetch=0,
            grid=grid,
            in_specs=[
                pl.BlockSpec((tile_b, obs_dim), lambda i: (i, 0)),   # obs tile
                pl.BlockSpec((obs_dim, h1), lambda i: (0, 0)),       # w1 (resident)
                pl.BlockSpec((1, h1), lambda i: (0, 0)),             # b1
                pl.BlockSpec((h1, h2), lambda i: (0, 0)),            # w2
                pl.BlockSpec((1, h2), lambda i: (0, 0)),             # b2
                pl.BlockSpec((h2, 2 * act_dim), lambda i: (0, 0)),   # fused head W
                pl.BlockSpec((1, 2 * act_dim), lambda i: (0, 0)),    # fused head b
                pl.BlockSpec((tile_b, act_dim), lambda i: (i, 0)),   # eps tile
            ],
            out_specs=pl.BlockSpec((tile_b, out_w), lambda i: (i, 0)),
        ),
        compiler_params=pltpu.CompilerParams(
            dimension_semantics=("parallel",)),   # megacore-shardable on v7x
    )(
        obs_p,
        params["w1"], params["b1"],
        params["w2"], params["b2"],
        w_head, b_head,
        eps_p,
    )

    pi = out[:B, 0:act_dim]
    mu_t = out[:B, act_dim:2 * act_dim]
    logp = out[:B, 2 * act_dim]
    return pi, mu_t, logp


def _reference(obs, params, eps):
    """Pure-JAX reference for correctness checking (mirrors the PyTorch module)."""
    h = jnp.maximum(obs @ params["w1"] + params["b1"], 0.0)
    h = jnp.maximum(h @ params["w2"] + params["b2"], 0.0)
    mu = h @ params["w_mu"] + params["b_mu"]
    log_std = jnp.clip(h @ params["w_ls"] + params["b_ls"], LOG_STD_MIN, LOG_STD_MAX)
    std = jnp.exp(log_std)
    a = mu + std * eps
    logp_el = -0.5 * jnp.square((a - mu) / std) - log_std - 0.5 * jnp.log(2.0 * jnp.pi)
    corr = 2.0 * (jnp.log(2.0) - a - jax.nn.softplus(-2.0 * a))
    logp = jnp.sum(logp_el, axis=-1) - jnp.sum(corr, axis=-1)
    return jnp.tanh(a), jnp.tanh(mu), logp


def init_params(key, obs_dim, hidden_sizes, act_dim):
    """Deterministic synthetic parameter init (shapes match the nn.Module)."""
    ks = jax.random.split(key, 8)
    h1, h2 = hidden_sizes
    scale = 0.1
    return {
        "w1": scale * jax.random.normal(ks[0], (obs_dim, h1), jnp.float32),
        "b1": scale * jax.random.normal(ks[1], (1, h1), jnp.float32),
        "w2": scale * jax.random.normal(ks[2], (h1, h2), jnp.float32),
        "b2": scale * jax.random.normal(ks[3], (1, h2), jnp.float32),
        "w_mu": scale * jax.random.normal(ks[4], (h2, act_dim), jnp.float32),
        "b_mu": scale * jax.random.normal(ks[5], (1, act_dim), jnp.float32),
        "w_ls": scale * jax.random.normal(ks[6], (h2, act_dim), jnp.float32),
        "b_ls": scale * jax.random.normal(ks[7], (1, act_dim), jnp.float32),
    }


if __name__ == "__main__":
    key = jax.random.PRNGKey(0)
    k_obs, k_eps, k_par = jax.random.split(key, 3)

    batch = 8
    obs_dim = 16
    hidden_sizes = (32, 32)
    act_dim = 4

    obs = jax.random.normal(k_obs, (batch, obs_dim), jnp.float32)
    # TODO(synk): rsample noise is generated host-side in JAX (no stateful torch RNG in-kernel).
    eps = jax.random.normal(k_eps, (batch, act_dim), jnp.float32)
    params = init_params(k_par, obs_dim, hidden_sizes, act_dim)

    pi, mu_t, logp = squashed_gaussian_actor(obs, params, eps)
    jax.block_until_ready((pi, mu_t, logp))

    # sanity check against pure-JAX reference
    pi_r, mu_r, logp_r = _reference(obs, params, eps)
    assert jnp.allclose(pi, pi_r, atol=1e-5, rtol=1e-5)
    assert jnp.allclose(mu_t, mu_r, atol=1e-5, rtol=1e-5)
    assert jnp.allclose(logp, logp_r, atol=1e-4, rtol=1e-4)

    print("KERNEL_OK")
</pallas_src>

<mosaic_0001>
module attributes {stable_mosaic.version = 11 : i64} {
  func.func @_actor_kernel(%arg0: i32, %arg1: memref<8x16xf32, #tpu.memory_space<vmem>>, %arg2: memref<16x32xf32, #tpu.memory_space<vmem>>, %arg3: memref<1x32xf32, #tpu.memory_space<vmem>>, %arg4: memref<32x32xf32, #tpu.memory_space<vmem>>, %arg5: memref<1x32xf32, #tpu.memory_space<vmem>>, %arg6: memref<32x8xf32, #tpu.memory_space<vmem>>, %arg7: memref<1x8xf32, #tpu.memory_space<vmem>>, %arg8: memref<8x4xf32, #tpu.memory_space<vmem>>, %arg9: memref<8x128xf32, #tpu.memory_space<vmem>>) attributes {dimension_semantics = [#tpu.dimension_semantics<parallel>], iteration_bounds = array<i64: 1>, scalar_prefetch = 0 : i64, scratch_operands = 0 : i64, tpu.core_type = #tpu.core_type<tc>, window_params = [{transform_indices = @transform_0, window_bounds = array<i64: 8, 16>}, {pipeline_mode = #tpu.pipeline_mode<synchronous>, transform_indices = @transform_1, window_bounds = array<i64: 16, 32>}, {pipeline_mode = #tpu.pipeline_mode<synchronous>, transform_indices = @transform_2, window_bounds = array<i64: 1, 32>}, {pipeline_mode = #tpu.pipeline_mode<synchronous>, transform_indices = @transform_3, window_bounds = array<i64: 32, 32>}, {pipeline_mode = #tpu.pipeline_mode<synchronous>, transform_indices = @transform_4, window_bounds = array<i64: 1, 32>}, {pipeline_mode = #tpu.pipeline_mode<synchronous>, transform_indices = @transform_5, window_bounds = array<i64: 32, 8>}, {pipeline_mode = #tpu.pipeline_mode<synchronous>, transform_indices = @transform_6, window_bounds = array<i64: 1, 8>}, {transform_indices = @transform_7, window_bounds = array<i64: 8, 4>}, {transform_indices = @transform_8, window_bounds = array<i64: 8, 128>}]} {
    %c0 = arith.constant 0 : index
    %c0_0 = arith.constant 0 : index
    %0 = vector.load %arg1[%c0, %c0_0] : memref<8x16xf32, #tpu.memory_space<vmem>>, vector<8x16xf32>
    %c0_1 = arith.constant 0 : index
    %c0_2 = arith.constant 0 : index
    %1 = vector.load %arg2[%c0_1, %c0_2] : memref<16x32xf32, #tpu.memory_space<vmem>>, vector<16x32xf32>
    %cst = arith.constant dense<0.000000e+00> : vector<8x32xf32>
    %2 = tpu.matmul %0, %1, %cst {dimension_numbers = #tpu.dot_dimension_numbers<[1], [0], [0], [1], [0, 0, 1, 1], [], []>} : vector<8x16xf32>, vector<16x32xf32>, vector<8x32xf32> -> vector<8x32xf32>
    %c0_3 = arith.constant 0 : index
    %c0_4 = arith.constant 0 : index
    %3 = vector.load %arg3[%c0_3, %c0_4] : memref<1x32xf32, #tpu.memory_space<vmem>>, vector<1x32xf32>
    %4 = vector.broadcast %3 : vector<1x32xf32> to vector<8x32xf32>
    %5 = arith.addf %2, %4 : vector<8x32xf32>
    %cst_5 = arith.constant 0.000000e+00 : f32
    %6 = vector.broadcast %cst_5 : f32 to vector<8x32xf32>
    %7 = arith.maximumf %5, %6 : vector<8x32xf32>
    %c0_6 = arith.constant 0 : index
    %c0_7 = arith.constant 0 : index
    %8 = vector.load %arg4[%c0_6, %c0_7] : memref<32x32xf32, #tpu.memory_space<vmem>>, vector<32x32xf32>
    %cst_8 = arith.constant dense<0.000000e+00> : vector<8x32xf32>
    %9 = tpu.matmul %7, %8, %cst_8 {dimension_numbers = #tpu.dot_dimension_numbers<[1], [0], [0], [1], [0, 0, 1, 1], [], []>} : vector<8x32xf32>, vector<32x32xf32>, vector<8x32xf32> -> vector<8x32xf32>
    %c0_9 = arith.constant 0 : index
    %c0_10 = arith.constant 0 : index
    %10 = vector.load %arg5[%c0_9, %c0_10] : memref<1x32xf32, #tpu.memory_space<vmem>>, vector<1x32xf32>
    %11 = vector.broadcast %10 : vector<1x32xf32> to vector<8x32xf32>
    %12 = arith.addf %9, %11 : vector<8x32xf32>
    %cst_11 = arith.constant 0.000000e+00 : f32
    %13 = vector.broadcast %cst_11 : f32 to vector<8x32xf32>
    %14 = arith.maximumf %12, %13 : vector<8x32xf32>
    %c0_12 = arith.constant 0 : index
    %c0_13 = arith.constant 0 : index
    %15 = vector.load %arg6[%c0_12, %c0_13] : memref<32x8xf32, #tpu.memory_space<vmem>>, vector<32x8xf32>
    %cst_14 = arith.constant dense<0.000000e+00> : vector<8x8xf32>
    %16 = tpu.matmul %14, %15, %cst_14 {dimension_numbers = #tpu.dot_dimension_numbers<[1], [0], [0], [1], [0, 0, 1, 1], [], []>} : vector<8x32xf32>, vector<32x8xf32>, vector<8x8xf32> -> vector<8x8xf32>
    %c0_15 = arith.constant 0 : index
    %c0_16 = arith.constant 0 : index
    %17 = vector.load %arg7[%c0_15, %c0_16] : memref<1x8xf32, #tpu.memory_space<vmem>>, vector<1x8xf32>
    %18 = vector.broadcast %17 : vector<1x8xf32> to vector<8x8xf32>
    %19 = arith.addf %16, %18 : vector<8x8xf32>
    %20 = vector.extract_strided_slice %19 {offsets = [0, 0], sizes = [8, 4], strides = [1, 1]} : vector<8x8xf32> to vector<8x4xf32>
    %21 = vector.extract_strided_slice %19 {offsets = [0, 4], sizes = [8, 4], strides = [1, 1]} : vector<8x8xf32> to vector<8x4xf32>
    %cst_17 = arith.constant -2.000000e+01 : f32
    %cst_18 = arith.constant 2.000000e+00 : f32
    %22 = vector.broadcast %cst_17 : f32 to vector<8x4xf32>
    %23 = arith.maximumf %22, %21 : vector<8x4xf32>
    %24 = vector.broadcast %cst_18 : f32 to vector<8x4xf32>
    %25 = arith.minimumf %24, %23 : vector<8x4xf32>
    %26 = math.exp %25 : vector<8x4xf32>
    %c0_19 = arith.constant 0 : index
    %c0_20 = arith.constant 0 : index
    %27 = vector.load %arg8[%c0_19, %c0_20] : memref<8x4xf32, #tpu.memory_space<vmem>>, vector<8x4xf32>
    %28 = arith.mulf %26, %27 : vector<8x4xf32>
    %29 = arith.addf %20, %28 : vector<8x4xf32>
    %cst_21 = arith.constant -5.000000e-01 : f32
    %30 = vector.broadcast %cst_21 : f32 to vector<8x4xf32>
    %31 = arith.mulf %30, %27 : vector<8x4xf32>
    %32 = arith.mulf %31, %27 : vector<8x4xf32>
    %33 = arith.subf %32, %25 : vector<8x4xf32>
    %cst_22 = arith.constant 0.918938517 : f32
    %34 = vector.broadcast %cst_22 : f32 to vector<8x4xf32>
    %35 = arith.subf %33, %34 : vector<8x4xf32>
    %cst_23 = arith.constant 0.693147182 : f32
    %36 = vector.broadcast %cst_23 : f32 to vector<8x4xf32>
    %37 = arith.subf %36, %29 : vector<8x4xf32>
    %cst_24 = arith.constant -2.000000e+00 : f32
    %38 = vector.broadcast %cst_24 : f32 to vector<8x4xf32>
    %39 = arith.mulf %38, %29 : vector<8x4xf32>
    %cst_25 = arith.constant 0.000000e+00 : f32
    %40 = vector.broadcast %cst_25 : f32 to vector<8x4xf32>
    %41 = arith.maximumf %39, %40 : vector<8x4xf32>
    %42 = vector.broadcast %cst_25 : f32 to vector<8x4xf32>
    %43 = arith.subf %39, %42 : vector<8x4xf32>
    %44 = arith.cmpf one, %43, %43 : vector<8x4xf32>
    %45 = vector.broadcast %cst_25 : f32 to vector<8x4xf32>
    %46 = arith.addf %39, %45 : vector<8x4xf32>
    %47 = math.absf %43 : vector<8x4xf32>
    %cst_26 = arith.constant 0.000000e+00 : f32
    %48 = vector.broadcast %cst_26 : f32 to vector<8x4xf32>
    %49 = arith.subf %48, %47 : vector<8x4xf32>
    %50 = math.exp %49 : vector<8x4xf32>
    %51 = math.log1p %50 : vector<8x4xf32>
    %52 = arith.addf %41, %51 : vector<8x4xf32>
    %53 = arith.select %44, %46, %52 : vector<8x4xi1>, vector<8x4xf32>
    %54 = arith.subf %37, %53 : vector<8x4xf32>
    %cst_27 = arith.constant 2.000000e+00 : f32
    %55 = vector.broadcast %cst_27 : f32 to vector<8x4xf32>
    %56 = arith.mulf %55, %54 : vector<8x4xf32>
    %57 = arith.subf %35, %56 : vector<8x4xf32>
    %cst_28 = arith.constant dense<0.000000e+00> : vector<8xf32>
    %58 = vector.multi_reduction <add>, %57, %cst_28 [1] : vector<8x4xf32> to vector<8xf32>
    %59 = vector.shape_cast %58 : vector<8xf32> to vector<8x1xf32>
    %60 = math.tanh %29 : vector<8x4xf32>
    %c0_29 = arith.constant 0 : index
    %c0_30 = arith.constant 0 : index
    %61 = vector.load %arg9[%c0_29, %c0_30] : memref<8x128xf32, #tpu.memory_space<vmem>>, vector<8x4xf32>
    tpu.vector_store %arg9[%c0_29, %c0_30], %60 {strides = array<i32>} : memref<8x128xf32, #tpu.memory_space<vmem>>, vector<8x4xf32>,
    %62 = math.tanh %20 : vector<8x4xf32>
    %c0_31 = arith.constant 0 : index
    %c4 = arith.constant 4 : index
    %63 = vector.load %arg9[%c0_31, %c4] : memref<8x128xf32, #tpu.memory_space<vmem>>, vector<8x4xf32>
    tpu.vector_store %arg9[%c0_31, %c4], %62 {strides = array<i32>} : memref<8x128xf32, #tpu.memory_space<vmem>>, vector<8x4xf32>,
    %c0_32 = arith.constant 0 : index
    %c8 = arith.constant 8 : index
    %64 = vector.load %arg9[%c0_32, %c8] : memref<8x128xf32, #tpu.memory_space<vmem>>, vector<8x1xf32>
    tpu.vector_store %arg9[%c0_32, %c8], %59 {strides = array<i32>} : memref<8x128xf32, #tpu.memory_space<vmem>>, vector<8x1xf32>,
    %cst_33 = arith.constant 0.000000e+00 : f32
    %65 = vector.broadcast %cst_33 : f32 to vector<8x119xf32>
    %c0_34 = arith.constant 0 : index
    %c9 = arith.constant 9 : index
    %66 = vector.load %arg9[%c0_34, %c9] : memref<8x128xf32, #tpu.memory_space<vmem>>, vector<8x119xf32>
    tpu.vector_store %arg9[%c0_34, %c9], %65 {strides = array<i32>} : memref<8x128xf32, #tpu.memory_space<vmem>>, vector<8x119xf32>,
    return
  }
  func.func @transform_0(%arg0: i32) -> (i32, i32) {
    %c0_i32 = arith.constant 0 : i32
    %c0_i32_0 = arith.constant 0 : i32
    return %arg0, %c0_i32 : i32, i32
  }
  func.func @transform_1(%arg0: i32) -> (i32, i32) {
    %c0_i32 = arith.constant 0 : i32
    %c0_i32_0 = arith.constant 0 : i32
    %c0_i32_1 = arith.constant 0 : i32
    return %c0_i32, %c0_i32_0 : i32, i32
  }
  func.func @transform_2(%arg0: i32) -> (i32, i32) {
    %c0_i32 = arith.constant 0 : i32
    %c0_i32_0 = arith.constant 0 : i32
    %c0_i32_1 = arith.constant 0 : i32
    return %c0_i32, %c0_i32_0 : i32, i32
  }
  func.func @transform_3(%arg0: i32) -> (i32, i32) {
    %c0_i32 = arith.constant 0 : i32
    %c0_i32_0 = arith.constant 0 : i32
    %c0_i32_1 = arith.constant 0 : i32
    return %c0_i32, %c0_i32_0 : i32, i32
  }
  func.func @transform_4(%arg0: i32) -> (i32, i32) {
    %c0_i32 = arith.constant 0 : i32
    %c0_i32_0 = arith.constant 0 : i32
    %c0_i32_1 = arith.constant 0 : i32
    return %c0_i32, %c0_i32_0 : i32, i32
  }
  func.func @transform_5(%arg0: i32) -> (i32, i32) {
    %c0_i32 = arith.constant 0 : i32
    %c0_i32_0 = arith.constant 0 : i32
    %c0_i32_1 = arith.constant 0 : i32
    return %c0_i32, %c0_i32_0 : i32, i32
  }
  func.func @transform_6(%arg0: i32) -> (i32, i32) {
    %c0_i32 = arith.constant 0 : i32
    %c0_i32_0 = arith.constant 0 : i32
    %c0_i32_1 = arith.constant 0 : i32
    return %c0_i32, %c0_i32_0 : i32, i32
  }
  func.func @transform_7(%arg0: i32) -> (i32, i32) {
    %c0_i32 = arith.constant 0 : i32
    %c0_i32_0 = arith.constant 0 : i32
    return %arg0, %c0_i32 : i32, i32
  }
  func.func @transform_8(%arg0: i32) -> (i32, i32) {
    %c0_i32 = arith.constant 0 : i32
    %c0_i32_0 = arith.constant 0 : i32
    return %arg0, %c0_i32 : i32, i32
  }
}

</mosaic_0001>

<llo_original>
// kernel: tpu_custom_call.1
$region0: #{tpu_custom_call.1}
  #allocation0 [shape = 'u32[]', space=smem, size = 0x4, offset = 0x4, fixed_abs, tag = 'smem constant byte address 0x4 - core index']
  #allocation1 [shape = 'u32[144,128]{1,0:T(1,128)}', space=vmem, size = 0x12000, scoped, tag = 'internal scratch']
  %s0 = inlined_call_operand.vmem [shape: f32[8,16], index: 0, kind: input, shape index: {}]
  %s1 = inlined_call_operand.vmem [shape: f32[16,32], index: 1, kind: input, shape index: {}]
  %s2 = inlined_call_operand.vmem [shape: f32[1,32], index: 2, kind: input, shape index: {}]
  %s3 = inlined_call_operand.vmem [shape: f32[32,32], index: 3, kind: input, shape index: {}]
  %s4 = inlined_call_operand.vmem [shape: f32[1,32], index: 4, kind: input, shape index: {}]
  %s5 = inlined_call_operand.vmem [shape: f32[32,8], index: 5, kind: input, shape index: {}]
  %s6 = inlined_call_operand.vmem [shape: f32[1,8], index: 6, kind: input, shape index: {}]
  %s7 = inlined_call_operand.vmem [shape: f32[8,4], index: 7, kind: input, shape index: {}]
  %s8 = inlined_call_operand.hbm [shape: f32[8,128], index: 8, kind: output, shape index: {}]
  %s9 = sld [smem:[#allocation0]]
  $region42: #{tpu_custom_call.1} parent=0
    _
  %s11 = ssub.s32 1, %s9
  %s12 = scalar_select 0, %s11, %s9
  $region1: #{tpu_custom_call.1} parent=0
    #allocation2 [shape = 'u8[4096]{0}', space=vmem, size = 0x1000, scoped, tag = 'output window, operand 0, single buffered']
    #allocation3 [shape = 's32[1]{0}', space=sflag, size = 0x4, scoped, tag = 'scoped memory for tpu_custom_call.1']
    %13 = vsyncpa [#allocation3], 0
    // Predicated region
    $region2: #{tpu_custom_call.1} parent=1 // pred_check
      _
    $region3: #{tpu_custom_call.1} parent=1 // pred_check_branch
      %15 = sbr.rel (0) target = $region5
    $region4: #{tpu_custom_call.1} parent=1 // pred_region
      _
    $region5: #{tpu_custom_call.1} parent=1 // pred_fallthru
      _
    // Predicated region
    $region6: #{tpu_custom_call.1} parent=1 // pred_check
      _
    $region7: #{tpu_custom_call.1} parent=1 // pred_check_branch
      %17 = sbr.rel (0) target = $region9
    $region8: #{tpu_custom_call.1} parent=1 // pred_region
      _
    $region9: #{tpu_custom_call.1} parent=1 // pred_fallthru
      _
    // Predicated region
    $region10: #{tpu_custom_call.1} parent=1 // pred_check
      _
    $region11: #{tpu_custom_call.1} parent=1 // pred_check_branch
      %19 = sbr.rel (0) target = $region13
    $region12: #{tpu_custom_call.1} parent=1 // pred_region
      _
    $region13: #{tpu_custom_call.1} parent=1 // pred_fallthru
      _
    // Predicated region
    $region14: #{tpu_custom_call.1} parent=1 // pred_check
      _
    $region15: #{tpu_custom_call.1} parent=1 // pred_check_branch
      %21 = sbr.rel (0) target = $region17
    $region16: #{tpu_custom_call.1} parent=1 // pred_region
      _
    $region17: #{tpu_custom_call.1} parent=1 // pred_fallthru
      _
    // Predicated region
    $region18: #{tpu_custom_call.1} parent=1 // pred_check
      _
    $region19: #{tpu_custom_call.1} parent=1 // pred_check_branch
      %23 = sbr.rel (0) target = $region21
    $region20: #{tpu_custom_call.1} parent=1 // pred_region
      _
    $region21: #{tpu_custom_call.1} parent=1 // pred_fallthru
      _
    // Predicated region
    $region22: #{tpu_custom_call.1} parent=1 // pred_check
      _
    $region23: #{tpu_custom_call.1} parent=1 // pred_check_branch
      %25 = sbr.rel (0) target = $region25
    $region24: #{tpu_custom_call.1} parent=1 // pred_region
      _
    $region25: #{tpu_custom_call.1} parent=1 // pred_fallthru
      _
    // Predicated region
    $region26: #{tpu_custom_call.1} parent=1 // pred_check
      _
    $region27: #{tpu_custom_call.1} parent=1 // pred_check_branch
      %27 = sbr.rel (0) target = $region29
    $region28: #{tpu_custom_call.1} parent=1 // pred_region
      _
    $region29: #{tpu_custom_call.1} parent=1 // pred_fallthru
      _
    // Predicated region
    $region30: #{tpu_custom_call.1} parent=1 // pred_check
      _
    $region31: #{tpu_custom_call.1} parent=1 // pred_check_branch
      %29 = sbr.rel (0) target = $region33
    $region32: #{tpu_custom_call.1} parent=1 // pred_region
      _
    $region33: #{tpu_custom_call.1} parent=1 // pred_fallthru
      _
    %v30 = vld [vmem:[%s0] sm:$0xff]
    %v31 = vld [vmem:[%s1] sm:$0xff]
    %v32 = vld [vmem:[%s1 + $0x8] sm:$0xff]
    %v33 = vld [vmem:[%s2] sm:$0x1]
    %v35 = vlaneseq
    %v36 = vshrl.u32 %v35, 7
    %v37 = vsub.s32 0, %v36
    %v38 = vrot.slane %v33, %v37
    %vm40 = vcmask 130048
    %v42 = vsel %vm40, %v30, 0
    %44 = vmatprep.subr.mxu0 0.0
    %45 = vmatpush1.msra.mxu0 %v31
    %46 = vmatprep.subr.mxu0 0.0
    %47 = vmatpush1.msra.mxu0 %v32
    %48 = vmatprep.subr.mxu0 0.0
    %49 = vmatpush1.msra.mxu0 0.0
    %50 = vmatprep.subr.mxu0 0.0
    %51 = vmatpush1.msra.mxu0 0.0
    %52 = vmatprep.subr.mxu0 0.0
    %53 = vmatpush1.msra.mxu0 0.0
    %54 = vmatprep.subr.mxu0 0.0
    %55 = vmatpush1.msra.mxu0 0.0
    %56 = vmatprep.subr.mxu0 0.0
    %57 = vmatpush1.msra.mxu0 0.0
    %58 = vmatprep.subr.mxu0 0.0
    %59 = vmatpush1.msra.mxu0 0.0
    %60 = vmatprep.subr.mxu0 0.0
    %61 = vmatpush1.msra.mxu0 0.0
    %62 = vmatprep.subr.mxu0 0.0
    %63 = vmatpush1.msra.mxu0 0.0
    %64 = vmatprep.subr.mxu0 0.0
    %65 = vmatpush1.msra.mxu0 0.0
    %66 = vmatprep.subr.mxu0 0.0
    %67 = vmatpush1.msra.mxu0 0.0
    %68 = vmatprep.subr.mxu0 0.0
    %69 = vmatpush1.msra.mxu0 0.0
    %70 = vmatprep.subr.mxu0 0.0
    %71 = vmatpush1.msra.mxu0 0.0
    %72 = vmatprep.subr.mxu0 0.0
    %73 = vmatpush1.msra.mxu0 0.0
    %74 = vmatprep.subr.mxu0 0.0
    %75 = vmatpush1.msra.mxu0 0.0
    %76 = vmatprep.subr.mxu0 0.0
    %77 = vmatpush1.msra.mxu0 0.0
    %78 = vmatprep.subr.mxu0 0.0
    %79 = vmatpush1.msra.mxu0 0.0
    %80 = vmatprep.subr.mxu0 0.0
    %81 = vmatpush1.msra.mxu0 0.0
    %82 = vmatprep.subr.mxu0 0.0
    %83 = vmatpush1.msra.mxu0 0.0
    %84 = vmatprep.subr.mxu0 0.0
    %85 = vmatpush1.msra.mxu0 0.0
    %86 = vmatprep.subr.mxu0 0.0
    %87 = vmatpush1.msra.mxu0 0.0
    %88 = vmatprep.subr.mxu0 0.0
    %89 = vmatpush1.msra.mxu0 0.0
    %90 = vmatprep.subr.mxu0 0.0
    %91 = vmatpush1.msra.mxu0 0.0
    %92 = vmatprep.subr.mxu0 0.0
    %93 = vmatpush1.msra.mxu0 0.0
    %94 = vmatprep.subr.mxu0 0.0
    %95 = vmatpush1.msra.mxu0 0.0
    %96 = vmatprep.subr.mxu0 0.0
    %97 = vmatpush1.msra.mxu0 0.0
    %98 = vmatprep.subr.mxu0 0.0
    %99 = vmatpush1.msra.mxu0 0.0
    %100 = vmatprep.subr.mxu0 0.0
    %101 = vmatpush1.msra.mxu0 0.0
    %102 = vmatprep.subr.mxu0 0.0
    %103 = vmatpush1.msra.mxu0 0.0
    %104 = vmatprep.subr.mxu0 0.0
    %105 = vmatpush1.msra.mxu0 0.0
    %106 = vmatprep.subr.mxu0 0.0
    %107 = vmatpush1.msra.mxu0 0.0
    %108 = vmatprep.mubr.f32.mxu0 0.0
    %109 = vmatmul.mubr.f32.gmra.mrb[0].mxu0 %v42
    %v110 = vpop.f32.mrb[0].mxu0
    %v111 = vadd.f32 %v38, %v110
    %v112 = vpop.f32.mrb[0].mxu0
    %113 = vdwg.mxu0
    %v114 = vmax.f32 %v111, 0.0
    %v115 = vld [vmem:[%s3] sm:$0xff]
    %v116 = vld [vmem:[%s3 + $0x8] sm:$0xff]
    %v117 = vld [vmem:[%s3 + $0x10] sm:$0xff]
    %v118 = vld [vmem:[%s3 + $0x18] sm:$0xff]
    %v119 = vld [vmem:[%s4] sm:$0x1]
    %v121 = vlaneseq
    %v122 = vshrl.u32 %v121, 7
    %v123 = vsub.s32 0, %v122
    %v124 = vrot.slane %v119, %v123
    %vm126 = vcmask 261120
    %v128 = vsel %vm126, %v114, 0
    %130 = vmatprep.subr.mxu0 0.0
    %131 = vmatpush1.msra.mxu0 %v115
    %132 = vmatprep.subr.mxu0 0.0
    %133 = vmatpush1.msra.mxu0 %v116
    %134 = vmatprep.subr.mxu0 0.0
    %135 = vmatpush1.msra.mxu0 %v117
    %136 = vmatprep.subr.mxu0 0.0
    %137 = vmatpush1.msra.mxu0 %v118
    %138 = vmatprep.subr.mxu0 0.0
    %139 = vmatpush1.msra.mxu0 0.0
    %140 = vmatprep.subr.mxu0 0.0
    %141 = vmatpush1.msra.mxu0 0.0
    %142 = vmatprep.subr.mxu0 0.0
    %143 = vmatpush1.msra.mxu0 0.0
    %144 = vmatprep.subr.mxu0 0.0
    %145 = vmatpush1.msra.mxu0 0.0
    %146 = vmatprep.subr.mxu0 0.0
    %147 = vmatpush1.msra.mxu0 0.0
    %148 = vmatprep.subr.mxu0 0.0
    %149 = vmatpush1.msra.mxu0 0.0
    %150 = vmatprep.subr.mxu0 0.0
    %151 = vmatpush1.msra.mxu0 0.0
    %152 = vmatprep.subr.mxu0 0.0
    %153 = vmatpush1.msra.mxu0 0.0
    %154 = vmatprep.subr.mxu0 0.0
    %155 = vmatpush1.msra.mxu0 0.0
    %156 = vmatprep.subr.mxu0 0.0
    %157 = vmatpush1.msra.mxu0 0.0
    %158 = vmatprep.subr.mxu0 0.0
    %159 = vmatpush1.msra.mxu0 0.0
    %160 = vmatprep.subr.mxu0 0.0
    %161 = vmatpush1.msra.mxu0 0.0
    %162 = vmatprep.subr.mxu0 0.0
    %163 = vmatpush1.msra.mxu0 0.0
    %164 = vmatprep.subr.mxu0 0.0
    %165 = vmatpush1.msra.mxu0 0.0
    %166 = vmatprep.subr.mxu0 0.0
    %167 = vmatpush1.msra.mxu0 0.0
    %168 = vmatprep.subr.mxu0 0.0
    %169 = vmatpush1.msra.mxu0 0.0
    %170 = vmatprep.subr.mxu0 0.0
    %171 = vmatpush1.msra.mxu0 0.0
    %172 = vmatprep.subr.mxu0 0.0
    %173 = vmatpush1.msra.mxu0 0.0
    %174 = vmatprep.subr.mxu0 0.0
    %175 = vmatpush1.msra.mxu0 0.0
    %176 = vmatprep.subr.mxu0 0.0
    %177 = vmatpush1.msra.mxu0 0.0
    %178 = vmatprep.subr.mxu0 0.0
    %179 = vmatpush1.msra.mxu0 0.0
    %180 = vmatprep.subr.mxu0 0.0
    %181 = vmatpush1.msra.mxu0 0.0
    %182 = vmatprep.subr.mxu0 0.0
    %183 = vmatpush1.msra.mxu0 0.0
    %184 = vmatprep.subr.mxu0 0.0
    %185 = vmatpush1.msra.mxu0 0.0
    %186 = vmatprep.subr.mxu0 0.0
    %187 = vmatpush1.msra.mxu0 0.0
    %188 = vmatprep.subr.mxu0 0.0
    %189 = vmatpush1.msra.mxu0 0.0
    %190 = vmatprep.subr.mxu0 0.0
    %191 = vmatpush1.msra.mxu0 0.0
    %192 = vmatprep.subr.mxu0 0.0
    %193 = vmatpush1.msra.mxu0 0.0
    %194 = vmatprep.mubr.f32.mxu0 0.0
    %195 = vmatmul.mubr.f32.gmra.mrb[0].mxu0 %v128
    %v196 = vpop.f32.mrb[0].mxu0
    %v197 = vadd.f32 %v124, %v196
    %v198 = vpop.f32.mrb[0].mxu0
    %199 = vdwg.mxu0
    %v200 = vmax.f32 %v197, 0.0
    %v201 = vld [vmem:[%s5] sm:$0xff]
    %v202 = vld [vmem:[%s5 + $0x8] sm:$0xff]
    %v203 = vld [vmem:[%s5 + $0x10] sm:$0xff]
    %v204 = vld [vmem:[%s5 + $0x18] sm:$0xff]
    %v205 = vld [vmem:[%s6] sm:$0x1]
    %v207 = vlaneseq
    %v208 = vshrl.u32 %v207, 7
    %v209 = vsub.s32 0, %v208
    %v210 = vrot.slane %v205, %v209
    %v213 = vsel %vm126, %v200, 0
    %215 = vmatprep.subr.mxu0 0.0
    %216 = vmatpush1.msra.mxu0 %v201
    %217 = vmatprep.subr.mxu0 0.0
    %218 = vmatpush1.msra.mxu0 %v202
    %219 = vmatprep.subr.mxu0 0.0
    %220 = vmatpush1.msra.mxu0 %v203
    %221 = vmatprep.subr.mxu0 0.0
    %222 = vmatpush1.msra.mxu0 %v204
    %223 = vmatprep.subr.mxu0 0.0
    %224 = vmatpush1.msra.mxu0 0.0
    %225 = vmatprep.subr.mxu0 0.0
    %226 = vmatpush1.msra.mxu0 0.0
    %227 = vmatprep.subr.mxu0 0.0
    %228 = vmatpush1.msra.mxu0 0.0
    %229 = vmatprep.subr.mxu0 0.0
    %230 = vmatpush1.msra.mxu0 0.0
    %231 = vmatprep.subr.mxu0 0.0
    %232 = vmatpush1.msra.mxu0 0.0
    %233 = vmatprep.subr.mxu0 0.0
    %234 = vmatpush1.msra.mxu0 0.0
    %235 = vmatprep.subr.mxu0 0.0
    %236 = vmatpush1.msra.mxu0 0.0
    %237 = vmatprep.subr.mxu0 0.0
    %238 = vmatpush1.msra.mxu0 0.0
    %239 = vmatprep.subr.mxu0 0.0
    %240 = vmatpush1.msra.mxu0 0.0
    %241 = vmatprep.subr.mxu0 0.0
    %242 = vmatpush1.msra.mxu0 0.0
    %243 = vmatprep.subr.mxu0 0.0
    %244 = vmatpush1.msra.mxu0 0.0
    %245 = vmatprep.subr.mxu0 0.0
    %246 = vmatpush1.msra.mxu0 0.0
    %247 = vmatprep.subr.mxu0 0.0
    %248 = vmatpush1.msra.mxu0 0.0
    %249 = vmatprep.subr.mxu0 0.0
    %250 = vmatpush1.msra.mxu0 0.0
    %251 = vmatprep.subr.mxu0 0.0
    %252 = vmatpush1.msra.mxu0 0.0
    %253 = vmatprep.subr.mxu0 0.0
    %254 = vmatpush1.msra.mxu0 0.0
    %255 = vmatprep.subr.mxu0 0.0
    %256 = vmatpush1.msra.mxu0 0.0
    %257 = vmatprep.subr.mxu0 0.0
    %258 = vmatpush1.msra.mxu0 0.0
    %259 = vmatprep.subr.mxu0 0.0
    %260 = vmatpush1.msra.mxu0 0.0
    %261 = vmatprep.subr.mxu0 0.0
    %262 = vmatpush1.msra.mxu0 0.0
    %263 = vmatprep.subr.mxu0 0.0
    %264 = vmatpush1.msra.mxu0 0.0
    %265 = vmatprep.subr.mxu0 0.0
    %266 = vmatpush1.msra.mxu0 0.0
    %267 = vmatprep.subr.mxu0 0.0
    %268 = vmatpush1.msra.mxu0 0.0
    %269 = vmatprep.subr.mxu0 0.0
    %270 = vmatpush1.msra.mxu0 0.0
    %271 = vmatprep.subr.mxu0 0.0
    %272 = vmatpush1.msra.mxu0 0.0
    %273 = vmatprep.subr.mxu0 0.0
    %274 = vmatpush1.msra.mxu0 0.0
    %275 = vmatprep.subr.mxu0 0.0
    %276 = vmatpush1.msra.mxu0 0.0
    %277 = vmatprep.subr.mxu0 0.0
    %278 = vmatpush1.msra.mxu0 0.0
    %279 = vmatprep.mubr.f32.mxu0 0.0
    %280 = vmatmul.mubr.f32.gmra.mrb[0].mxu0 %v213
    %v281 = vpop.f32.mrb[0].mxu0
    %v282 = vadd.f32 %v210, %v281
    %v283 = vpop.f32.mrb[0].mxu0
    %284 = vdwg.mxu0
    %v285 = vmax.f32 %v282, -20.0
    %v286 = vmin.f32 %v285, 2.0
    %v287 = vmul.f32 %v286, 1.442695
    %v288 = vpow.pop %v287
    %v289 = vld [vmem:[%s7] sm:$0xff]
    %291 = vrot.lane.b32.xlu0 %v289, 4
    %v292 = vpop.permute.xlu0 %291
    %v294 = vmul.f32 %v288, %v292
    %296 = vrot.lane.b32.xlu0 %v294, 124
    %v297 = vpop.permute.xlu0 %296
    %v299 = vadd.f32 %v282, %v297
    %v300 = vmul.f32 %v289, -0.5
    %v301 = vmul.f32 %v300, %v289
    %303 = vrot.lane.b32.xlu0 %v286, 124
    %v304 = vpop.permute.xlu0 %303
    %v306 = vsub.f32 %v301, %v304
    %v307 = vsub.f32 %v306, 0.9189385
    %v308 = vsub.f32 0.6931472, %v299
    %v309 = vmul.f32 %v299, -2.0
    %v310 = vmax.f32 %v309, 0.0
    %vm311 = vcmp.ne.f32.partialorder %v309, %v309
    %v312 = vadd.f32 %v309, 0.0
    %v313 = vand.u32 2147483647, %v309
    %v314 = vsub.f32 0.0, %v313
    %v315 = vmul.f32 %v314, 1.442695
    %v316 = vpow.pop %v315
    %v317 = vadd.f32 %v316, 1.0
    %v318 = vlog2.pop %v317
    %v319 = vmul.f32 %v318, 0.6931472
    %v320 = vmul.f32 -0.5, %v316
    %v321 = vadd.f32 %v320, 1.0
    %v322 = vmul.f32 %v321, %v316
    %v323 = vand.u32 2147483647, %v316
    %vm324 = vcmp.lt.f32.partialorder %v323, 0.0004427343
    %v325 = vsel %vm324, %v322, %v319
    %v326 = vadd.f32 %v310, %v325
    %v327 = vsel %vm311, %v312, %v326
    %v328 = vsub.f32 %v308, %v327
    %v329 = vmul.f32 %v328, 2.0
    %v330 = vsub.f32 %v307, %v329
    %vm331 = vcmask 31744
    %v332 = vsel %vm331, %v330, 0.0
    %333 = vadd.xlane.f32.xlu0 %v332
    %v334 = vpop.xlane.xlu0 %333
    %v335 = vtanh.pop %v299
    %336 = vst.msk [vmem:[#allocation2] sm:$0xff] %vm331, %v335
    %v337 = vtanh.pop %v282
    %339 = vrot.lane.b32.xlu0 %v337, 4
    %v340 = vpop.permute.xlu0 %339
    %vm342 = vcmask 64544
    %343 = vst.msk [vmem:[#allocation2] sm:$0xff] %vm342, %v340
    %vm344 = vcmask 72768
    %345 = vst.msk [vmem:[#allocation2] sm:$0xff] %vm344, %v334
    %vm346 = vcmask 1047624
    %347 = vst.msk [vmem:[#allocation2] sm:$0xff] %vm346, 0.0
    // Predicated region
    $region34: #{tpu_custom_call.1} parent=1 // pred_check
      _
    $region35: #{tpu_custom_call.1} parent=1 // pred_check_branch
      %349 = sbr.rel (0) target = $region37
    $region36: #{tpu_custom_call.1} parent=1 // pred_region
      %s351 = ssub.s32 128, 128
      %352 = vsyncadd [#allocation3], %s351
      %s354 = sshll.u32 [#allocation2], 4
      %s355 = int_to_ptr.vmem [resolvable:$true] %s354
      %357 = dma.vmem_to_hbm [thread:$0]  %s355, 128, %s8, [#allocation3]
    $region37: #{tpu_custom_call.1} parent=1 // pred_fallthru
      _
    // Predicated region
    $region38: #{tpu_custom_call.1} parent=1 // pred_check
      _
    $region39: #{tpu_custom_call.1} parent=1 // pred_check_branch
      %359 = sbr.rel (0) target = $region41
    $region40: #{tpu_custom_call.1} parent=1 // pred_region
      %360 = dma.done [#allocation3], 128
    $region41: #{tpu_custom_call.1} parent=1 // pred_fallthru
      _
    %361 = vsyncpa [#allocation3], 1

</llo_original>
